<compile_context>
chip_gen: v7x
topology: tpu7x:2x2x1
jax: 0.10.0
libtpu: 0.0.40
codegen_flags: <defaults>
</compile_context>

<pallas_src>
import functools

import jax
import jax.numpy as jnp
from jax.experimental import pallas as pl
from jax.experimental.pallas import tpu as pltpu


_BN_EPS = 1e-5  # PyTorch BatchNorm1d default


def _prediction_mlp_kernel(x_ref, w1_ref, gamma_ref, beta_ref, w2_ref, b2_ref,
                           out_ref, h_ref):
    """Fused Linear -> BatchNorm1d(train) -> ReLU -> Linear, tiled over out_dim.

    Grid axis 0 walks out_dim column tiles.  Layer1 + BN + ReLU is computed once
    (grid step 0) into the persistent VMEM scratch `h_ref`; every grid step then
    runs one layer-2 column tile, so the w2-in and out-back DMAs pipeline behind
    the MXU work of neighbouring steps.
    """
    @pl.when(pl.program_id(0) == 0)
    def _():
        # ---- layer1 linear: bf16 MXU operands, f32 accumulation -------------------
        # Layer-1 bias omitted: training-mode BN mean subtraction cancels it exactly.
        h = jnp.dot(x_ref[...].astype(jnp.bfloat16), w1_ref[...],
                    preferred_element_type=jnp.float32)

        # ---- BatchNorm1d (training mode: batch stats, biased variance), f32 -------
        mean = jnp.mean(h, axis=0, keepdims=True)          # [1, H] sublane reduction
        centered = h - mean
        var = jnp.mean(centered * centered, axis=0, keepdims=True)
        inv_std = jax.lax.rsqrt(var + _BN_EPS)              # EUP rsqrt
        h = centered * (inv_std * gamma_ref[...]) + beta_ref[...]

        # ---- ReLU; stash bf16 (it feeds the MXU as bf16 anyway, halves scratch) ---
        h_ref[...] = jnp.maximum(h, 0.0).astype(h_ref.dtype)

    # ---- layer2 linear for this out_dim tile: bf16 operands, f32 accumulation -----
    out = jnp.dot(h_ref[...], w2_ref[...], preferred_element_type=jnp.float32)
    out_ref[...] = (out + b2_ref[...]).astype(out_ref.dtype)


@functools.partial(jax.jit, static_argnames=("block_n",))
def prediction_mlp_forward(x, params, *, block_n=512):
    """x: [B, in_dim] (f32 or bf16) -> [B, out_dim] float32.

    Weights are kernel-layout: w1 [in, hid] bf16, w2 [hid, out] bf16,
    gamma / beta / b2 as [1, F] f32 rows (broadcast inside the kernel).
    """
    B, in_dim = x.shape
    hid = params["w1"].shape[1]
    out_dim = params["w2"].shape[1]

    # Lane-aligned out_dim tile for layer 2 (128-multiple, or the full dim).
    tn = block_n if (out_dim % block_n == 0 and block_n % 128 == 0) else out_dim
    grid = (out_dim // tn,)

    flops = 2 * B * in_dim * hid + 2 * B * hid * out_dim
    bytes_accessed = (
        x.size * x.dtype.itemsize
        + sum(params[k].size * params[k].dtype.itemsize
              for k in ("w1", "gamma", "beta", "w2", "b2"))
        + B * out_dim * 4)

    return pl.pallas_call(
        _prediction_mlp_kernel,
        out_shape=jax.ShapeDtypeStruct((B, out_dim), jnp.float32),
        grid_spec=pltpu.PrefetchScalarGridSpec(
            num_scalar_prefetch=0,
            grid=grid,
            in_specs=[
                # Grid-invariant resident blocks: DMAed once, reused every step.
                pl.BlockSpec((B, in_dim), lambda j: (0, 0)),    # x
                pl.BlockSpec((in_dim, hid), lambda j: (0, 0)),  # w1 (bf16)
                pl.BlockSpec((1, hid), lambda j: (0, 0)),       # gamma
                pl.BlockSpec((1, hid), lambda j: (0, 0)),       # beta
                # Pipelined per-step blocks (out_dim tiles).
                pl.BlockSpec((hid, tn), lambda j: (0, j)),      # w2 (bf16)
                pl.BlockSpec((1, tn), lambda j: (0, j)),        # b2
            ],
            out_specs=pl.BlockSpec((B, tn), lambda j: (0, j)),
            scratch_shapes=[pltpu.VMEM((B, hid), jnp.bfloat16)],  # persistent h
        ),
        compiler_params=pltpu.CompilerParams(
            # h scratch carries across the out_dim axis -> sequential ("arbitrary").
            dimension_semantics=("arbitrary",),
            vmem_limit_bytes=48 * 1024 * 1024,
        ),
        cost_estimate=pl.CostEstimate(flops=flops, transcendentals=0,
                                      bytes_accessed=bytes_accessed),
    )(x, params["w1"], params["gamma"], params["beta"],
      params["w2"], params["b2"])


def init_params(key, in_dim, hidden_dim, out_dim):
    """Deterministic synthetic weights in kernel layout ([in, out], bf16 matmul weights)."""
    ks = jax.random.split(key, 6)
    s1 = 1.0 / jnp.sqrt(in_dim)
    s2 = 1.0 / jnp.sqrt(hidden_dim)
    w1 = jax.random.uniform(ks[0], (in_dim, hidden_dim), minval=-s1, maxval=s1,
                            dtype=jnp.float32).astype(jnp.bfloat16)
    b1 = jax.random.uniform(ks[1], (1, hidden_dim), minval=-s1, maxval=s1,
                            dtype=jnp.float32)   # only used by the reference (see below)
    gamma = 1.0 + 0.1 * jax.random.normal(ks[2], (1, hidden_dim), dtype=jnp.float32)
    beta = 0.1 * jax.random.normal(ks[3], (1, hidden_dim), dtype=jnp.float32)
    w2 = jax.random.uniform(ks[4], (hidden_dim, out_dim), minval=-s2, maxval=s2,
                            dtype=jnp.float32).astype(jnp.bfloat16)
    b2 = jax.random.uniform(ks[5], (1, out_dim), minval=-s2, maxval=s2,
                            dtype=jnp.float32)
    return dict(w1=w1, b1=b1, gamma=gamma, beta=beta, w2=w2, b2=b2)


def reference_forward(x, params):
    """Pure-JAX reference mirroring the module (INCLUDING the layer-1 bias) with the
    kernel's numerics (bf16 MXU inputs, f32 element-wise math).  Matching it verifies
    that dropping b1 in the kernel is exact under training-mode BatchNorm."""
    h = jnp.dot(x.astype(jnp.bfloat16), params["w1"],
                preferred_element_type=jnp.float32) + params["b1"]
    mean = jnp.mean(h, axis=0, keepdims=True)
    centered = h - mean
    var = jnp.mean(centered * centered, axis=0, keepdims=True)
    h = centered * (jax.lax.rsqrt(var + _BN_EPS) * params["gamma"]) + params["beta"]
    h = jnp.maximum(h, 0.0)
    out = jnp.dot(h.astype(jnp.bfloat16), params["w2"],
                  preferred_element_type=jnp.float32) + params["b2"]
    return out


if __name__ == "__main__":
    # Small shapes consistent with the module's bottleneck structure
    # (in=2048, hidden=512, out=2048 scaled down; all feature dims lane-aligned).
    # NOTE: do not profile on this toy shape — production batch should be a multiple
    # of 256 (v6e/v7x MXU) / 128 (v5e) for full MXU passes.
    B, IN_DIM, HIDDEN_DIM, OUT_DIM = 8, 512, 128, 512

    key = jax.random.PRNGKey(0)
    k_param, k_x = jax.random.split(key)
    params = init_params(k_param, IN_DIM, HIDDEN_DIM, OUT_DIM)
    x = jax.random.normal(k_x, (B, IN_DIM), dtype=jnp.float32)

    # block_n=256 -> grid of 2 out_dim tiles, exercising the pipelined path.
    out = prediction_mlp_forward(x, params, block_n=256)
    jax.block_until_ready(out)

    out_ref = reference_forward(x, params)
    assert out.shape == (B, OUT_DIM)
    assert jnp.allclose(out, out_ref, atol=1e-2, rtol=1e-2), (
        float(jnp.max(jnp.abs(out - out_ref))))

    print("KERNEL_OK")
</pallas_src>

<mosaic_0001>
module attributes {stable_mosaic.version = 11 : i64} {
  func.func @_prediction_mlp_kernel(%arg0: i32, %arg1: memref<8x512xf32, #tpu.memory_space<vmem>>, %arg2: memref<512x128xbf16, #tpu.memory_space<vmem>>, %arg3: memref<1x128xf32, #tpu.memory_space<vmem>>, %arg4: memref<1x128xf32, #tpu.memory_space<vmem>>, %arg5: memref<128x256xbf16, #tpu.memory_space<vmem>>, %arg6: memref<1x256xf32, #tpu.memory_space<vmem>>, %arg7: memref<8x256xf32, #tpu.memory_space<vmem>>, %arg8: memref<8x128xbf16, #tpu.memory_space<vmem>>) attributes {dimension_semantics = [#tpu.dimension_semantics<arbitrary>], iteration_bounds = array<i64: 2>, scalar_prefetch = 0 : i64, scratch_operands = 1 : i64, tpu.core_type = #tpu.core_type<tc>, window_params = [{pipeline_mode = #tpu.pipeline_mode<synchronous>, transform_indices = @transform_0, window_bounds = array<i64: 8, 512>}, {pipeline_mode = #tpu.pipeline_mode<synchronous>, transform_indices = @transform_1, window_bounds = array<i64: 512, 128>}, {pipeline_mode = #tpu.pipeline_mode<synchronous>, transform_indices = @transform_2, window_bounds = array<i64: 1, 128>}, {pipeline_mode = #tpu.pipeline_mode<synchronous>, transform_indices = @transform_3, window_bounds = array<i64: 1, 128>}, {transform_indices = @transform_4, window_bounds = array<i64: 128, 256>}, {transform_indices = @transform_5, window_bounds = array<i64: 1, 256>}, {transform_indices = @transform_6, window_bounds = array<i64: 8, 256>}]} {
    %c0_i32 = arith.constant 0 : i32
    %0 = arith.cmpi eq, %arg0, %c0_i32 : i32
    %1 = arith.extui %0 : i1 to i32
    %c0_i32_0 = arith.constant 0 : i32
    %2 = arith.cmpi ne, %1, %c0_i32_0 : i32
    scf.if %2 {
      %c0_8 = arith.constant 0 : index
      %c0_9 = arith.constant 0 : index
      %10 = vector.load %arg1[%c0_8, %c0_9] : memref<8x512xf32, #tpu.memory_space<vmem>>, vector<8x512xf32>
      %11 = arith.truncf %10 : vector<8x512xf32> to vector<8x512xbf16>
      %c0_10 = arith.constant 0 : index
      %c0_11 = arith.constant 0 : index
      %12 = vector.load %arg2[%c0_10, %c0_11] : memref<512x128xbf16, #tpu.memory_space<vmem>>, vector<512x128xbf16>
      %cst_12 = arith.constant dense<0.000000e+00> : vector<8x128xf32>
      %13 = tpu.matmul %11, %12, %cst_12 {dimension_numbers = #tpu.dot_dimension_numbers<[1], [0], [0], [1], [0, 0, 1, 1], [], []>} : vector<8x512xbf16>, vector<512x128xbf16>, vector<8x128xf32> -> vector<8x128xf32>
      %cst_13 = arith.constant dense<0.000000e+00> : vector<128xf32>
      %14 = vector.multi_reduction <add>, %13, %cst_13 [0] : vector<8x128xf32> to vector<128xf32>
      %15 = vector.shape_cast %14 : vector<128xf32> to vector<1x128xf32>
      %cst_14 = arith.constant 8.000000e+00 : f32
      %16 = vector.broadcast %cst_14 : f32 to vector<1x128xf32>
      %17 = arith.divf %15, %16 : vector<1x128xf32>
      %18 = vector.broadcast %17 : vector<1x128xf32> to vector<8x128xf32>
      %19 = arith.subf %13, %18 : vector<8x128xf32>
      %20 = arith.mulf %19, %19 : vector<8x128xf32>
      %cst_15 = arith.constant dense<0.000000e+00> : vector<128xf32>
      %21 = vector.multi_reduction <add>, %20, %cst_15 [0] : vector<8x128xf32> to vector<128xf32>
      %22 = vector.shape_cast %21 : vector<128xf32> to vector<1x128xf32>
      %cst_16 = arith.constant 8.000000e+00 : f32
      %23 = vector.broadcast %cst_16 : f32 to vector<1x128xf32>
      %24 = arith.divf %22, %23 : vector<1x128xf32>
      %cst_17 = arith.constant 9.99999974E-6 : f32
      %25 = vector.broadcast %cst_17 : f32 to vector<1x128xf32>
      %26 = arith.addf %24, %25 : vector<1x128xf32>
      %27 = math.rsqrt %26 : vector<1x128xf32>
      %c0_18 = arith.constant 0 : index
      %c0_19 = arith.constant 0 : index
      %28 = vector.load %arg3[%c0_18, %c0_19] : memref<1x128xf32, #tpu.memory_space<vmem>>, vector<1x128xf32>
      %29 = arith.mulf %27, %28 : vector<1x128xf32>
      %30 = vector.broadcast %29 : vector<1x128xf32> to vector<8x128xf32>
      %31 = arith.mulf %19, %30 : vector<8x128xf32>
      %c0_20 = arith.constant 0 : index
      %c0_21 = arith.constant 0 : index
      %32 = vector.load %arg4[%c0_20, %c0_21] : memref<1x128xf32, #tpu.memory_space<vmem>>, vector<1x128xf32>
      %33 = vector.broadcast %32 : vector<1x128xf32> to vector<8x128xf32>
      %34 = arith.addf %31, %33 : vector<8x128xf32>
      %cst_22 = arith.constant 0.000000e+00 : f32
      %35 = vector.broadcast %cst_22 : f32 to vector<8x128xf32>
      %36 = arith.maximumf %34, %35 : vector<8x128xf32>
      %37 = arith.truncf %36 : vector<8x128xf32> to vector<8x128xbf16>
      %c0_23 = arith.constant 0 : index
      %c0_24 = arith.constant 0 : index
      %38 = vector.load %arg8[%c0_23, %c0_24] : memref<8x128xbf16, #tpu.memory_space<vmem>>, vector<8x128xbf16>
      tpu.vector_store %arg8[%c0_23, %c0_24], %37 {strides = array<i32>} : memref<8x128xbf16, #tpu.memory_space<vmem>>, vector<8x128xbf16>,
    } else {
    }
    %c0 = arith.constant 0 : index
    %c0_1 = arith.constant 0 : index
    %3 = vector.load %arg8[%c0, %c0_1] : memref<8x128xbf16, #tpu.memory_space<vmem>>, vector<8x128xbf16>
    %c0_2 = arith.constant 0 : index
    %c0_3 = arith.constant 0 : index
    %4 = vector.load %arg5[%c0_2, %c0_3] : memref<128x256xbf16, #tpu.memory_space<vmem>>, vector<128x256xbf16>
    %cst = arith.constant dense<0.000000e+00> : vector<8x256xf32>
    %5 = tpu.matmul %3, %4, %cst {dimension_numbers = #tpu.dot_dimension_numbers<[1], [0], [0], [1], [0, 0, 1, 1], [], []>} : vector<8x128xbf16>, vector<128x256xbf16>, vector<8x256xf32> -> vector<8x256xf32>
    %c0_4 = arith.constant 0 : index
    %c0_5 = arith.constant 0 : index
    %6 = vector.load %arg6[%c0_4, %c0_5] : memref<1x256xf32, #tpu.memory_space<vmem>>, vector<1x256xf32>
    %7 = vector.broadcast %6 : vector<1x256xf32> to vector<8x256xf32>
    %8 = arith.addf %5, %7 : vector<8x256xf32>
    %c0_6 = arith.constant 0 : index
    %c0_7 = arith.constant 0 : index
    %9 = vector.load %arg7[%c0_6, %c0_7] : memref<8x256xf32, #tpu.memory_space<vmem>>, vector<8x256xf32>
    tpu.vector_store %arg7[%c0_6, %c0_7], %8 {strides = array<i32>} : memref<8x256xf32, #tpu.memory_space<vmem>>, vector<8x256xf32>,
    return
  }
  func.func @transform_0(%arg0: i32) -> (i32, i32) {
    %c0_i32 = arith.constant 0 : i32
    %c0_i32_0 = arith.constant 0 : i32
    %c0_i32_1 = arith.constant 0 : i32
    return %c0_i32, %c0_i32_0 : i32, i32
  }
  func.func @transform_1(%arg0: i32) -> (i32, i32) {
    %c0_i32 = arith.constant 0 : i32
    %c0_i32_0 = arith.constant 0 : i32
    %c0_i32_1 = arith.constant 0 : i32
    return %c0_i32, %c0_i32_0 : i32, i32
  }
  func.func @transform_2(%arg0: i32) -> (i32, i32) {
    %c0_i32 = arith.constant 0 : i32
    %c0_i32_0 = arith.constant 0 : i32
    %c0_i32_1 = arith.constant 0 : i32
    return %c0_i32, %c0_i32_0 : i32, i32
  }
  func.func @transform_3(%arg0: i32) -> (i32, i32) {
    %c0_i32 = arith.constant 0 : i32
    %c0_i32_0 = arith.constant 0 : i32
    %c0_i32_1 = arith.constant 0 : i32
    return %c0_i32, %c0_i32_0 : i32, i32
  }
  func.func @transform_4(%arg0: i32) -> (i32, i32) {
    %c0_i32 = arith.constant 0 : i32
    %c0_i32_0 = arith.constant 0 : i32
    return %c0_i32, %arg0 : i32, i32
  }
  func.func @transform_5(%arg0: i32) -> (i32, i32) {
    %c0_i32 = arith.constant 0 : i32
    %c0_i32_0 = arith.constant 0 : i32
    return %c0_i32, %arg0 : i32, i32
  }
  func.func @transform_6(%arg0: i32) -> (i32, i32) {
    %c0_i32 = arith.constant 0 : i32
    %c0_i32_0 = arith.constant 0 : i32
    return %c0_i32, %arg0 : i32, i32
  }
}

</mosaic_0001>

<llo_original>
// kernel: prediction_mlp_forward.1
$region0: #{prediction_mlp_forward.1}
  #allocation0 [shape = 'u32[]', space=smem, size = 0x4, offset = 0x4, fixed_abs, tag = 'smem constant byte address 0x4 - core index']
  #allocation1 [shape = 'u32[144,128]{1,0:T(1,128)}', space=vmem, size = 0x12000, scoped, tag = 'internal scratch']
  #allocation2 [shape = 'bf16[8,128]{1,0:T(8,128)(2,1)}', space=vmem, size = 0x800, scoped, tag = 'scratch operand']
  %s0 = inlined_call_operand.hbm [shape: f32[8,512], index: 0, kind: input, shape index: {}]
  %s1 = inlined_call_operand.hbm [shape: bf16[512,128], index: 1, kind: input, shape index: {}]
  %s2 = inlined_call_operand.vmem [shape: f32[1,128], index: 2, kind: input, shape index: {}]
  %s3 = inlined_call_operand.vmem [shape: f32[1,128], index: 3, kind: input, shape index: {}]
  %s4 = inlined_call_operand.hbm [shape: bf16[128,512], index: 4, kind: input, shape index: {}]
  %s5 = inlined_call_operand.hbm [shape: f32[1,512], index: 5, kind: input, shape index: {}]
  %s6 = inlined_call_operand.hbm [shape: f32[8,512], index: 6, kind: output, shape index: {}]
  %s7 = sld [smem:[#allocation0]]
  $region77: #{prediction_mlp_forward.1} parent=0
    _
  %s9 = ssub.s32 1, %s7
  %s10 = scalar_select 0, %s9, %s7
  $region1: #{prediction_mlp_forward.1} parent=0
    #allocation3 [shape = 'u8[16384]{0}', space=vmem, size = 0x4000, scoped, tag = 'input window, operand 0, single buffered']
    #allocation4 [shape = 's32[2]{0}', space=sflag, size = 0x8, scoped, tag = 'scoped memory for prediction_mlp_forward.1']
    #allocation5 [shape = 's32[2]{0}', space=sflag, size = 0x8, scoped, tag = 'scoped memory for prediction_mlp_forward.1']
    #allocation6 [shape = 'u8[131072]{0}', space=vmem, size = 0x20000, scoped, tag = 'input window, operand 1, single buffered']
    #allocation7 [shape = 's32[1]{0}', space=sflag, size = 0x4, scoped, tag = 'scoped memory for prediction_mlp_forward.1']
    #allocation8 [shape = 'u8[131072]{0}', space=vmem, size = 0x20000, scoped, tag = 'input window, operand 4']
    #allocation9 [shape = 'u8[2048]{0}', space=vmem, size = 0x800, scoped, tag = 'input window, operand 5']
    #allocation10 [shape = 'u8[16384]{0}', space=vmem, size = 0x4000, scoped, tag = 'output window, operand 0']
    %11 = vsyncpa [#allocation4], 0
    %12 = vsyncpa [#allocation7], 0
    %13 = vsyncpa [#allocation5], 0
    %s14 = scalar_lea.sflag [#allocation5], 1
    %15 = vsyncpa %s14, 0
    loop: start=0, step=1, limit=4
    $region2: #{prediction_mlp_forward.1} parent=1 // loop_pre_header
      _
    $region3: #{prediction_mlp_forward.1} parent=1 // loop_header
      %s17 = sphi 0, %s21
      %p18 = scmp.ge.s32.totalorder %s17, 4
      %s25 = sphi 0, %s25
      %s27 = sphi 0, %s25
      %s28 = sphi 0, %s27
      %s42 = sphi 0, %s28
      %s46 = sphi 0, %s46
      %s48 = sphi 0, %s46
      %s49 = sphi 0, %s48
      %s63 = sphi 0, %s49
      %s67 = sphi 0, %s67
      %s69 = sphi 0, %s67
      %s70 = sphi 0, %s69
      %s84 = sphi 0, %s70
      %s88 = sphi 0, %s88
      %s90 = sphi 0, %s88
      %s91 = sphi 0, %s90
      %s105 = sphi 0, %s91
      %s111 = sphi 0, %s113
      %s114 = sphi 0, %s111
      %s115 = sphi 0, %s114
      %s131 = sphi 0, %s115
      %s137 = sphi 0, %s139
      %s140 = sphi 0, %s137
      %s141 = sphi 0, %s140
      %s157 = sphi 0, %s141
      %s163 = sphi 0, %s165
      %s166 = sphi 0, %s163
      %s167 = sphi 0, %s166
      %s183 = sphi 0, %s167
    $region4: #{prediction_mlp_forward.1} parent=1 // loop_header_branch
      %20 = sbr.rel (%p18) target = $region8
    $region5: #{prediction_mlp_forward.1} parent=1 // loop_body
      %s22 = ssub.s32 %s17, 1
      %s23 = ssub.s32 %s17, 2
      %s24 = sadd.s32 %s17, 1
      %s26 = sadd.s32 %s25, 1
      %p29 = scmp.eq.s32.totalorder %s17, 1
      %p30 = scmp.ne.s32.totalorder %s25, %s27
      %p31 = scmp.eq.s32.totalorder %s17, 0
      %p32 = por %p30, %p31
      %p33 = scmp.ne.s32.totalorder %s25, %s27
      %p34 = scmp.eq.s32.totalorder %s22, 1
      %p35 = por %p33, %p34
      %p36 = scmp.ne.s32.totalorder %s27, %s28
      %p37 = scmp.eq.s32.totalorder %s22, 0
      %p38 = por %p36, %p37
      %p39 = scmp.ne.s32.totalorder %s27, %s28
      %p40 = scmp.eq.s32.totalorder %s23, 1
      %p41 = por %p39, %p40
      %p43 = scmp.ne.s32.totalorder %s28, %s42
      %p44 = scmp.eq.s32.totalorder %s23, 0
      %p45 = por %p43, %p44
      %s47 = sadd.s32 %s46, 1
      %p50 = scmp.eq.s32.totalorder %s17, 1
      %p51 = scmp.ne.s32.totalorder %s46, %s48
      %p52 = scmp.eq.s32.totalorder %s17, 0
      %p53 = por %p51, %p52
      %p54 = scmp.ne.s32.totalorder %s46, %s48
      %p55 = scmp.eq.s32.totalorder %s22, 1
      %p56 = por %p54, %p55
      %p57 = scmp.ne.s32.totalorder %s48, %s49
      %p58 = scmp.eq.s32.totalorder %s22, 0
      %p59 = por %p57, %p58
      %p60 = scmp.ne.s32.totalorder %s48, %s49
      %p61 = scmp.eq.s32.totalorder %s23, 1
      %p62 = por %p60, %p61
      %p64 = scmp.ne.s32.totalorder %s49, %s63
      %p65 = scmp.eq.s32.totalorder %s23, 0
      %p66 = por %p64, %p65
      %s68 = sadd.s32 %s67, 1
      %p71 = scmp.eq.s32.totalorder %s17, 1
      %p72 = scmp.ne.s32.totalorder %s67, %s69
      %p73 = scmp.eq.s32.totalorder %s17, 0
      %p74 = por %p72, %p73
      %p75 = scmp.ne.s32.totalorder %s67, %s69
      %p76 = scmp.eq.s32.totalorder %s22, 1
      %p77 = por %p75, %p76
      %p78 = scmp.ne.s32.totalorder %s69, %s70
      %p79 = scmp.eq.s32.totalorder %s22, 0
      %p80 = por %p78, %p79
      %p81 = scmp.ne.s32.totalorder %s69, %s70
      %p82 = scmp.eq.s32.totalorder %s23, 1
      %p83 = por %p81, %p82
      %p85 = scmp.ne.s32.totalorder %s70, %s84
      %p86 = scmp.eq.s32.totalorder %s23, 0
      %p87 = por %p85, %p86
      %s89 = sadd.s32 %s88, 1
      %p92 = scmp.eq.s32.totalorder %s17, 1
      %p93 = scmp.ne.s32.totalorder %s88, %s90
      %p94 = scmp.eq.s32.totalorder %s17, 0
      %p95 = por %p93, %p94
      %p96 = scmp.ne.s32.totalorder %s88, %s90
      %p97 = scmp.eq.s32.totalorder %s22, 1
      %p98 = por %p96, %p97
      %p99 = scmp.ne.s32.totalorder %s90, %s91
      %p100 = scmp.eq.s32.totalorder %s22, 0
      %p101 = por %p99, %p100
      %p102 = scmp.ne.s32.totalorder %s90, %s91
      %p103 = scmp.eq.s32.totalorder %s23, 1
      %p104 = por %p102, %p103
      %p106 = scmp.ne.s32.totalorder %s91, %s105
      %p107 = scmp.eq.s32.totalorder %s23, 0
      %p108 = por %p106, %p107
      %s109 = ssub.s32 %s17, %s24
      %p110 = scmp.eq.s32.totalorder %s109, 0
      %s112 = sadd.s32 %s111, 1
      %s113 = scalar_select %p110, %s111, %s112
      %p116 = pneg %p110
      %p117 = scmp.eq.s32.totalorder %s17, 1
      %p118 = por %p116, %p117
      %p119 = scmp.ne.s32.totalorder %s111, %s114
      %p120 = scmp.eq.s32.totalorder %s17, 0
      %p121 = por %p119, %p120
      %p122 = scmp.ne.s32.totalorder %s111, %s114
      %p123 = scmp.eq.s32.totalorder %s22, 1
      %p124 = por %p122, %p123
      %p125 = scmp.ne.s32.totalorder %s114, %s115
      %p126 = scmp.eq.s32.totalorder %s22, 0
      %p127 = por %p125, %p126
      %p128 = scmp.ne.s32.totalorder %s114, %s115
      %p129 = scmp.eq.s32.totalorder %s23, 1
      %p130 = por %p128, %p129
      %p132 = scmp.ne.s32.totalorder %s115, %s131
      %p133 = scmp.eq.s32.totalorder %s23, 0
      %p134 = por %p132, %p133
      %s135 = ssub.s32 %s17, %s24
      %p136 = scmp.eq.s32.totalorder %s135, 0
      %s138 = sadd.s32 %s137, 1
      %s139 = scalar_select %p136, %s137, %s138
      %p142 = pneg %p136
      %p143 = scmp.eq.s32.totalorder %s17, 1
      %p144 = por %p142, %p143
      %p145 = scmp.ne.s32.totalorder %s137, %s140
      %p146 = scmp.eq.s32.totalorder %s17, 0
      %p147 = por %p145, %p146
      %p148 = scmp.ne.s32.totalorder %s137, %s140
      %p149 = scmp.eq.s32.totalorder %s22, 1
      %p150 = por %p148, %p149
      %p151 = scmp.ne.s32.totalorder %s140, %s141
      %p152 = scmp.eq.s32.totalorder %s22, 0
      %p153 = por %p151, %p152
      %p154 = scmp.ne.s32.totalorder %s140, %s141
      %p155 = scmp.eq.s32.totalorder %s23, 1
      %p156 = por %p154, %p155
      %p158 = scmp.ne.s32.totalorder %s141, %s157
      %p159 = scmp.eq.s32.totalorder %s23, 0
      %p160 = por %p158, %p159
      %s161 = ssub.s32 %s17, %s24
      %p162 = scmp.eq.s32.totalorder %s161, 0
      %s164 = sadd.s32 %s163, 1
      %s165 = scalar_select %p162, %s163, %s164
      %p168 = pneg %p162
      %p169 = scmp.eq.s32.totalorder %s17, 1
      %p170 = por %p168, %p169
      %p171 = scmp.ne.s32.totalorder %s163, %s166
      %p172 = scmp.eq.s32.totalorder %s17, 0
      %p173 = por %p171, %p172
      %p174 = scmp.ne.s32.totalorder %s163, %s166
      %p175 = scmp.eq.s32.totalorder %s22, 1
      %p176 = por %p174, %p175
      %p177 = scmp.ne.s32.totalorder %s166, %s167
      %p178 = scmp.eq.s32.totalorder %s22, 0
      %p179 = por %p177, %p178
      %p180 = scmp.ne.s32.totalorder %s166, %s167
      %p181 = scmp.eq.s32.totalorder %s23, 1
      %p182 = por %p180, %p181
      %p184 = scmp.ne.s32.totalorder %s167, %s183
      %p185 = scmp.eq.s32.totalorder %s23, 0
      %p186 = por %p184, %p185
      %p187 = scmp.le.s32.totalorder 1, %s17
      %p188 = scmp.lt.s32.totalorder %s17, 3
      %p189 = pnand %p187, %p188
      %p190 = pneg %p189
      // Predicated region
      $region9: #{prediction_mlp_forward.1} parent=5 // pred_check
        _
      $region10: #{prediction_mlp_forward.1} parent=5 // pred_check_branch
        %192 = sbr.rel (%p189) target = $region12
      $region11: #{prediction_mlp_forward.1} parent=5 // pred_region
        %s193 = ssub.s32 %s17, 1
        // Predicated region
        $region13: #{prediction_mlp_forward.1} parent=11 // pred_check
          %p194 = pneg %p38
        $region14: #{prediction_mlp_forward.1} parent=11 // pred_check_branch
          %196 = sbr.rel (%p194) target = $region16
        $region15: #{prediction_mlp_forward.1} parent=11 // pred_region
          %s198 = ssub.s32 512, 512
          %199 = vsyncadd [#allocation4], %s198
          %s201 = sshll.u32 [#allocation3], 4
          %s202 = int_to_ptr.vmem [resolvable:$true] %s201
          %204 = dma.hbm_to_vmem [thread:$0]  %s0, 512, %s202, [#allocation4]
        $region16: #{prediction_mlp_forward.1} parent=11 // pred_fallthru
          _
        // Predicated region
        $region17: #{prediction_mlp_forward.1} parent=11 // pred_check
          %p205 = pneg %p59
        $region18: #{prediction_mlp_forward.1} parent=11 // pred_check_branch
          %207 = sbr.rel (%p205) target = $region20
        $region19: #{prediction_mlp_forward.1} parent=11 // pred_region
          %s209 = ssub.s32 4096, 4096
          %210 = vsyncadd [#allocation7], %s209
          %s211 = sshll.u32 [#allocation6], 4
          %s212 = int_to_ptr.vmem [resolvable:$true] %s211
          %217 = dma.hbm_to_vmem [thread:$0]  %s1, 4096, %s212, [#allocation7], 64, 64, 4
        $region20: #{prediction_mlp_forward.1} parent=11 // pred_fallthru
          _
        // Predicated region
        $region21: #{prediction_mlp_forward.1} parent=11 // pred_check
          %p218 = pneg %p80
        $region22: #{prediction_mlp_forward.1} parent=11 // pred_check_branch
          %220 = sbr.rel (%p218) target = $region24
        $region23: #{prediction_mlp_forward.1} parent=11 // pred_region
          _
        $region24: #{prediction_mlp_forward.1} parent=11 // pred_fallthru
          _
        // Predicated region
        $region25: #{prediction_mlp_forward.1} parent=11 // pred_check
          %p221 = pneg %p101
        $region26: #{prediction_mlp_forward.1} parent=11 // pred_check_branch
          %223 = sbr.rel (%p221) target = $region28
        $region27: #{prediction_mlp_forward.1} parent=11 // pred_region
          _
        $region28: #{prediction_mlp_forward.1} parent=11 // pred_fallthru
          _
      $region12: #{prediction_mlp_forward.1} parent=5 // pred_fallthru
        _
      %p224 = scmp.lt.s32.totalorder %s17, 2
      // Predicated region
      $region29: #{prediction_mlp_forward.1} parent=5 // pred_check
        %p225 = pneg %p224
      $region30: #{prediction_mlp_forward.1} parent=5 // pred_check_branch
        %227 = sbr.rel (%p225) target = $region32
      $region31: #{prediction_mlp_forward.1} parent=5 // pred_region
        // Predicated region
        $region33: #{prediction_mlp_forward.1} parent=31 // pred_check
          %p228 = pneg %p121
        $region34: #{prediction_mlp_forward.1} parent=31 // pred_check_branch
          %230 = sbr.rel (%p228) target = $region36
        $region35: #{prediction_mlp_forward.1} parent=31 // pred_region
          %s231 = sand.u32 %s17, 1
          %s232 = scalar_lea.sflag [#allocation4], %s231
          %s233 = sand.u32 %s111, 1
          %s234 = smul.addr %s233, 128
          %s235 = scalar_lea.vmem [#allocation8], %s234
          %s236 = smul.u32 2, %s17
          %s238 = ssub.s32 2048, 2048
          %239 = vsyncadd %s232, %s238
          %s240 = smul.addr %s236, 64
          %s241 = scalar_lea.hbm %s4, %s240
          %s242 = sshll.u32 %s235, 4
          %s243 = int_to_ptr.vmem [resolvable:$true] %s242
          %248 = dma.hbm_to_vmem [thread:$0]  %s241, 2048, %s243, %s232, 256, 128, 8
        $region36: #{prediction_mlp_forward.1} parent=31 // pred_fallthru
          _
        // Predicated region
        $region37: #{prediction_mlp_forward.1} parent=31 // pred_check
          %p249 = pneg %p147
        $region38: #{prediction_mlp_forward.1} parent=31 // pred_check_branch
          %251 = sbr.rel (%p249) target = $region40
        $region39: #{prediction_mlp_forward.1} parent=31 // pred_region
          %s252 = sand.u32 %s17, 1
          %s253 = scalar_lea.sflag [#allocation4], %s252
          %s254 = sand.u32 %s137, 1
          %s255 = smul.addr %s254, 2
          %s256 = scalar_lea.vmem [#allocation9], %s255
          %s257 = smul.u32 2, %s17
          %s259 = ssub.s32 32, 32
          %260 = vsyncadd %s253, %s259
          %s261 = smul.addr %s257, 16
          %s262 = scalar_lea.hbm %s5, %s261
          %s264 = sshll.u32 %s256, 4
          %s265 = int_to_ptr.vmem [resolvable:$true] %s264
          %267 = dma.hbm_to_vmem [thread:$0]  %s262, 32, %s265, %s253
        $region40: #{prediction_mlp_forward.1} parent=31 // pred_fallthru
          _
      $region32: #{prediction_mlp_forward.1} parent=5 // pred_fallthru
        _
      %p268 = scmp.le.s32.totalorder 1, %s17
      %p269 = scmp.lt.s32.totalorder %s17, 3
      %p270 = pnand %p268, %p269
      %p271 = pneg %p270
      // Predicated region
      $region41: #{prediction_mlp_forward.1} parent=5 // pred_check
        _
      $region42: #{prediction_mlp_forward.1} parent=5 // pred_check_branch
        %273 = sbr.rel (%p270) target = $region44
      $region43: #{prediction_mlp_forward.1} parent=5 // pred_region
        %s274 = ssub.s32 %s17, 1
        // Predicated region
        $region45: #{prediction_mlp_forward.1} parent=43 // pred_check
          %p275 = pneg %p38
        $region46: #{prediction_mlp_forward.1} parent=43 // pred_check_branch
          %277 = sbr.rel (%p275) target = $region48
        $region47: #{prediction_mlp_forward.1} parent=43 // pred_region
          %278 = dma.done [#allocation4], 512
        $region48: #{prediction_mlp_forward.1} parent=43 // pred_fallthru
          _
        // Predicated region
        $region49: #{prediction_mlp_forward.1} parent=43 // pred_check
          %p279 = pneg %p59
        $region50: #{prediction_mlp_forward.1} parent=43 // pred_check_branch
          %281 = sbr.rel (%p279) target = $region52
        $region51: #{prediction_mlp_forward.1} parent=43 // pred_region
          %282 = dma.done [#allocation7], 4096
        $region52: #{prediction_mlp_forward.1} parent=43 // pred_fallthru
          _
        %s283 = sand.u32 %s22, 1
        %s284 = scalar_lea.sflag [#allocation4], %s283
        %s285 = sand.u32 %s114, 1
        %s286 = smul.addr %s285, 128
        %s287 = scalar_lea.vmem [#allocation8], %s286
        // Predicated region
        $region53: #{prediction_mlp_forward.1} parent=43 // pred_check
          %p288 = pneg %p127
        $region54: #{prediction_mlp_forward.1} parent=43 // pred_check_branch
          %290 = sbr.rel (%p288) target = $region56
        $region55: #{prediction_mlp_forward.1} parent=43 // pred_region
          %291 = dma.done %s284, 2048
        $region56: #{prediction_mlp_forward.1} parent=43 // pred_fallthru
          _
        %s292 = sand.u32 %s22, 1
        %s293 = scalar_lea.sflag [#allocation4], %s292
        %s294 = sand.u32 %s140, 1
        %s295 = smul.addr %s294, 2
        %s296 = scalar_lea.vmem [#allocation9], %s295
        // Predicated region
        $region57: #{prediction_mlp_forward.1} parent=43 // pred_check
          %p297 = pneg %p153
        $region58: #{prediction_mlp_forward.1} parent=43 // pred_check_branch
          %299 = sbr.rel (%p297) target = $region60
        $region59: #{prediction_mlp_forward.1} parent=43 // pred_region
          %300 = dma.done %s293, 32
        $region60: #{prediction_mlp_forward.1} parent=43 // pred_fallthru
          _
        %p301 = pneg %p38
        %p302 = pneg %p35
        %p303 = pneg %p59
        %p304 = pneg %p56
        %p305 = pneg %p80
        %p306 = pneg %p77
        %p307 = pneg %p101
        %p308 = pneg %p98
        %s309 = sand.u32 %s22, 1
        %s310 = scalar_lea.sflag [#allocation4], %s309
        %s311 = sand.u32 %s114, 1
        %s312 = smul.addr %s311, 128
        %s313 = scalar_lea.vmem [#allocation8], %s312
        %p314 = pneg %p127
        %p315 = pneg %p124
        %s316 = sand.u32 %s22, 1
        %s317 = scalar_lea.sflag [#allocation4], %s316
        %s318 = sand.u32 %s140, 1
        %s319 = smul.addr %s318, 2
        %s320 = scalar_lea.vmem [#allocation9], %s319
        %p321 = pneg %p153
        %p322 = pneg %p150
        %p323 = pneg %p179
        %p324 = pneg %p176
        %s325 = sand.u32 %s166, 1
        %s326 = scalar_lea.sflag [#allocation5], %s325
        %s327 = sand.u32 %s166, 1
        %s328 = smul.addr %s327, 16
        %s329 = scalar_lea.vmem [#allocation10], %s328
        %s330 = smul.u32 2, %s22
        %s331 = smul.u32 2, %s22
        %s332 = smul.u32 2, %s22
        %p334 = scmp.eq.s32.totalorder %s22, 0
        // Predicated region
        $region61: #{prediction_mlp_forward.1} parent=43 // pred_check
          %p335 = pneg %p334
        $region62: #{prediction_mlp_forward.1} parent=43 // pred_check_branch
          %337 = sbr.rel (%p335) target = $region64
        $region63: #{prediction_mlp_forward.1} parent=43 // pred_region
          %v338 = vld [vmem:[#allocation3] sm:$0xff]
          %v339 = vld [vmem:[#allocation3 + $0x8] sm:$0xff]
          %v340 = vld [vmem:[#allocation3 + $0x10] sm:$0xff]
          %v341 = vld [vmem:[#allocation3 + $0x18] sm:$0xff]
          %v342 = vpack.c.bf16 %v338, %v338
          %v343 = vpack.c.bf16 %v339, %v339
          %v344 = vpack.c.bf16 %v340, %v340
          %v345 = vpack.c.bf16 %v341, %v341
          %v346 = vld [vmem:[#allocation6] sm:$0xf]
          %v347 = vld [vmem:[#allocation6 + $0x4] sm:$0xf]
          %v348 = vld [vmem:[#allocation6 + $0x8] sm:$0xf]
          %v349 = vld [vmem:[#allocation6 + $0xc] sm:$0xf]
          %v350 = vld [vmem:[#allocation6 + $0x10] sm:$0xf]
          %v351 = vld [vmem:[#allocation6 + $0x14] sm:$0xf]
          %v352 = vld [vmem:[#allocation6 + $0x18] sm:$0xf]
          %v353 = vld [vmem:[#allocation6 + $0x1c] sm:$0xf]
          %v354 = vld [vmem:[#allocation6 + $0x20] sm:$0xf]
          %v355 = vld [vmem:[#allocation6 + $0x24] sm:$0xf]
          %v356 = vld [vmem:[#allocation6 + $0x28] sm:$0xf]
          %v357 = vld [vmem:[#allocation6 + $0x2c] sm:$0xf]
          %v358 = vld [vmem:[#allocation6 + $0x30] sm:$0xf]
          %v359 = vld [vmem:[#allocation6 + $0x34] sm:$0xf]
          %v360 = vld [vmem:[#allocation6 + $0x38] sm:$0xf]
          %v361 = vld [vmem:[#allocation6 + $0x3c] sm:$0xf]
          %v362 = vld [vmem:[#allocation6 + $0x40] sm:$0xf]
          %v363 = vld [vmem:[#allocation6 + $0x44] sm:$0xf]
          %v364 = vld [vmem:[#allocation6 + $0x48] sm:$0xf]
          %v365 = vld [vmem:[#allocation6 + $0x4c] sm:$0xf]
          %v366 = vld [vmem:[#allocation6 + $0x50] sm:$0xf]
          %v367 = vld [vmem:[#allocation6 + $0x54] sm:$0xf]
          %v368 = vld [vmem:[#allocation6 + $0x58] sm:$0xf]
          %v369 = vld [vmem:[#allocation6 + $0x5c] sm:$0xf]
          %v370 = vld [vmem:[#allocation6 + $0x60] sm:$0xf]
          %v371 = vld [vmem:[#allocation6 + $0x64] sm:$0xf]
          %v372 = vld [vmem:[#allocation6 + $0x68] sm:$0xf]
          %v373 = vld [vmem:[#allocation6 + $0x6c] sm:$0xf]
          %v374 = vld [vmem:[#allocation6 + $0x70] sm:$0xf]
          %v375 = vld [vmem:[#allocation6 + $0x74] sm:$0xf]
          %v376 = vld [vmem:[#allocation6 + $0x78] sm:$0xf]
          %v377 = vld [vmem:[#allocation6 + $0x7c] sm:$0xf]
          %v378 = vld [vmem:[#allocation6 + $0x80] sm:$0xf]
          %v379 = vld [vmem:[#allocation6 + $0x84] sm:$0xf]
          %v380 = vld [vmem:[#allocation6 + $0x88] sm:$0xf]
          %v381 = vld [vmem:[#allocation6 + $0x8c] sm:$0xf]
          %v382 = vld [vmem:[#allocation6 + $0x90] sm:$0xf]
          %v383 = vld [vmem:[#allocation6 + $0x94] sm:$0xf]
          %v384 = vld [vmem:[#allocation6 + $0x98] sm:$0xf]
          %v385 = vld [vmem:[#allocation6 + $0x9c] sm:$0xf]
          %v386 = vld [vmem:[#allocation6 + $0xa0] sm:$0xf]
          %v387 = vld [vmem:[#allocation6 + $0xa4] sm:$0xf]
          %v388 = vld [vmem:[#allocation6 + $0xa8] sm:$0xf]
          %v389 = vld [vmem:[#allocation6 + $0xac] sm:$0xf]
          %v390 = vld [vmem:[#allocation6 + $0xb0] sm:$0xf]
          %v391 = vld [vmem:[#allocation6 + $0xb4] sm:$0xf]
          %v392 = vld [vmem:[#allocation6 + $0xb8] sm:$0xf]
          %v393 = vld [vmem:[#allocation6 + $0xbc] sm:$0xf]
          %v394 = vld [vmem:[#allocation6 + $0xc0] sm:$0xf]
          %v395 = vld [vmem:[#allocation6 + $0xc4] sm:$0xf]
          %v396 = vld [vmem:[#allocation6 + $0xc8] sm:$0xf]
          %v397 = vld [vmem:[#allocation6 + $0xcc] sm:$0xf]
          %v398 = vld [vmem:[#allocation6 + $0xd0] sm:$0xf]
          %v399 = vld [vmem:[#allocation6 + $0xd4] sm:$0xf]
          %v400 = vld [vmem:[#allocation6 + $0xd8] sm:$0xf]
          %v401 = vld [vmem:[#allocation6 + $0xdc] sm:$0xf]
          %v402 = vld [vmem:[#allocation6 + $0xe0] sm:$0xf]
          %v403 = vld [vmem:[#allocation6 + $0xe4] sm:$0xf]
          %v404 = vld [vmem:[#allocation6 + $0xe8] sm:$0xf]
          %v405 = vld [vmem:[#allocation6 + $0xec] sm:$0xf]
          %v406 = vld [vmem:[#allocation6 + $0xf0] sm:$0xf]
          %v407 = vld [vmem:[#allocation6 + $0xf4] sm:$0xf]
          %v408 = vld [vmem:[#allocation6 + $0xf8] sm:$0xf]
          %v409 = vld [vmem:[#allocation6 + $0xfc] sm:$0xf]
          %v474 = vunpack.c.l.b16 %v346
          %v475 = vunpack.c.l.b16 %v347
          %v476 = vunpack.c.l.b16 %v348
          %v477 = vunpack.c.l.b16 %v349
          %v478 = vunpack.c.l.b16 %v350
          %v479 = vunpack.c.l.b16 %v351
          %v480 = vunpack.c.l.b16 %v352
          %v481 = vunpack.c.l.b16 %v353
          %v482 = vunpack.c.l.b16 %v354
          %v483 = vunpack.c.l.b16 %v355
          %v484 = vunpack.c.l.b16 %v356
          %v485 = vunpack.c.l.b16 %v357
          %v486 = vunpack.c.l.b16 %v358
          %v487 = vunpack.c.l.b16 %v359
          %v488 = vunpack.c.l.b16 %v360
          %v489 = vunpack.c.l.b16 %v361
          %v490 = vunpack.c.l.b16 %v362
          %v491 = vunpack.c.l.b16 %v363
          %v492 = vunpack.c.l.b16 %v364
          %v493 = vunpack.c.l.b16 %v365
          %v494 = vunpack.c.l.b16 %v366
          %v495 = vunpack.c.l.b16 %v367
          %v496 = vunpack.c.l.b16 %v368
          %v497 = vunpack.c.l.b16 %v369
          %v498 = vunpack.c.l.b16 %v370
          %v499 = vunpack.c.l.b16 %v371
          %v500 = vunpack.c.l.b16 %v372
          %v501 = vunpack.c.l.b16 %v373
          %v502 = vunpack.c.l.b16 %v374
          %v503 = vunpack.c.l.b16 %v375
          %v504 = vunpack.c.l.b16 %v376
          %v505 = vunpack.c.l.b16 %v377
          %v506 = vunpack.c.l.b16 %v378
          %v507 = vunpack.c.l.b16 %v379
          %v508 = vunpack.c.l.b16 %v380
          %v509 = vunpack.c.l.b16 %v381
          %v510 = vunpack.c.l.b16 %v382
          %v511 = vunpack.c.l.b16 %v383
          %v512 = vunpack.c.l.b16 %v384
          %v513 = vunpack.c.l.b16 %v385
          %v514 = vunpack.c.l.b16 %v386
          %v515 = vunpack.c.l.b16 %v387
          %v516 = vunpack.c.l.b16 %v388
          %v517 = vunpack.c.l.b16 %v389
          %v518 = vunpack.c.l.b16 %v390
          %v519 = vunpack.c.l.b16 %v391
          %v520 = vunpack.c.l.b16 %v392
          %v521 = vunpack.c.l.b16 %v393
          %v522 = vunpack.c.l.b16 %v394
          %v523 = vunpack.c.l.b16 %v395
          %v524 = vunpack.c.l.b16 %v396
          %v525 = vunpack.c.l.b16 %v397
          %v526 = vunpack.c.l.b16 %v398
          %v527 = vunpack.c.l.b16 %v399
          %v528 = vunpack.c.l.b16 %v400
          %v529 = vunpack.c.l.b16 %v401
          %v530 = vunpack.c.l.b16 %v402
          %v531 = vunpack.c.l.b16 %v403
          %v532 = vunpack.c.l.b16 %v404
          %v533 = vunpack.c.l.b16 %v405
          %v534 = vunpack.c.l.b16 %v406
          %v535 = vunpack.c.l.b16 %v407
          %v536 = vunpack.c.l.b16 %v408
          %v537 = vunpack.c.l.b16 %v409
          %v538 = vpack.c.b16 %v475, %v474
          %v539 = vpack.c.b16 %v477, %v476
          %v540 = vpack.c.b16 %v479, %v478
          %v541 = vpack.c.b16 %v481, %v480
          %v542 = vpack.c.b16 %v483, %v482
          %v543 = vpack.c.b16 %v485, %v484
          %v544 = vpack.c.b16 %v487, %v486
          %v545 = vpack.c.b16 %v489, %v488
          %v546 = vpack.c.b16 %v491, %v490
          %v547 = vpack.c.b16 %v493, %v492
          %v548 = vpack.c.b16 %v495, %v494
          %v549 = vpack.c.b16 %v497, %v496
          %v550 = vpack.c.b16 %v499, %v498
          %v551 = vpack.c.b16 %v501, %v500
          %v552 = vpack.c.b16 %v503, %v502
          %v553 = vpack.c.b16 %v505, %v504
          %v554 = vpack.c.b16 %v507, %v506
          %v555 = vpack.c.b16 %v509, %v508
          %v556 = vpack.c.b16 %v511, %v510
          %v557 = vpack.c.b16 %v513, %v512
          %v558 = vpack.c.b16 %v515, %v514
          %v559 = vpack.c.b16 %v517, %v516
          %v560 = vpack.c.b16 %v519, %v518
          %v561 = vpack.c.b16 %v521, %v520
          %v562 = vpack.c.b16 %v523, %v522
          %v563 = vpack.c.b16 %v525, %v524
          %v564 = vpack.c.b16 %v527, %v526
          %v565 = vpack.c.b16 %v529, %v528
          %v566 = vpack.c.b16 %v531, %v530
          %v567 = vpack.c.b16 %v533, %v532
          %v568 = vpack.c.b16 %v535, %v534
          %v569 = vpack.c.b16 %v537, %v536
          %602 = vmatprep.subr.bf16.mxu0 0
          %603 = vmatpush1.bf16.msra.mxu0 %v538
          %604 = vmatprep.subr.bf16.mxu0 0
          %605 = vmatpush1.bf16.msra.mxu0 %v539
          %606 = vmatprep.subr.bf16.mxu0 0
          %607 = vmatpush1.bf16.msra.mxu0 %v540
          %608 = vmatprep.subr.bf16.mxu0 0
          %609 = vmatpush1.bf16.msra.mxu0 %v541
          %610 = vmatprep.subr.bf16.mxu0 0
          %611 = vmatpush1.bf16.msra.mxu0 %v542
          %612 = vmatprep.subr.bf16.mxu0 0
          %613 = vmatpush1.bf16.msra.mxu0 %v543
          %614 = vmatprep.subr.bf16.mxu0 0
          %615 = vmatpush1.bf16.msra.mxu0 %v544
          %616 = vmatprep.subr.bf16.mxu0 0
          %617 = vmatpush1.bf16.msra.mxu0 %v545
          %618 = vmatprep.subr.bf16.mxu0 0
          %619 = vmatpush1.bf16.msra.mxu0 %v546
          %620 = vmatprep.subr.bf16.mxu0 0
          %621 = vmatpush1.bf16.msra.mxu0 %v547
          %622 = vmatprep.subr.bf16.mxu0 0
          %623 = vmatpush1.bf16.msra.mxu0 %v548
          %624 = vmatprep.subr.bf16.mxu0 0
          %625 = vmatpush1.bf16.msra.mxu0 %v549
          %626 = vmatprep.subr.bf16.mxu0 0
          %627 = vmatpush1.bf16.msra.mxu0 %v550
          %628 = vmatprep.subr.bf16.mxu0 0
          %629 = vmatpush1.bf16.msra.mxu0 %v551
          %630 = vmatprep.subr.bf16.mxu0 0
          %631 = vmatpush1.bf16.msra.mxu0 %v552
          %632 = vmatprep.subr.bf16.mxu0 0
          %633 = vmatpush1.bf16.msra.mxu0 %v553
          %634 = vmatprep.mubr.bf16.mxu0 %v343
          %635 = vmatmul.mubr.bf16.gmra.mrb[0].mxu0 %v342
          %v636 = vpop.f32.mrb[0].mxu0
          %v637 = vadd.f32 0.0, %v636
          %v638 = vpop.f32.mrb[0].mxu0
          %v639 = vpop.f32.mrb[0].mxu0
          %v640 = vpop.f32.mrb[0].mxu0
          %641 = vdwg.mxu0
          %642 = vmatprep.subr.bf16.mxu0 0
          %643 = vmatpush1.bf16.msra.mxu0 %v554
          %644 = vmatprep.subr.bf16.mxu0 0
          %645 = vmatpush1.bf16.msra.mxu0 %v555
          %646 = vmatprep.subr.bf16.mxu0 0
          %647 = vmatpush1.bf16.msra.mxu0 %v556
          %648 = vmatprep.subr.bf16.mxu0 0
          %649 = vmatpush1.bf16.msra.mxu0 %v557
          %650 = vmatprep.subr.bf16.mxu0 0
          %651 = vmatpush1.bf16.msra.mxu0 %v558
          %652 = vmatprep.subr.bf16.mxu0 0
          %653 = vmatpush1.bf16.msra.mxu0 %v559
          %654 = vmatprep.subr.bf16.mxu0 0
          %655 = vmatpush1.bf16.msra.mxu0 %v560
          %656 = vmatprep.subr.bf16.mxu0 0
          %657 = vmatpush1.bf16.msra.mxu0 %v561
          %658 = vmatprep.subr.bf16.mxu0 0
          %659 = vmatpush1.bf16.msra.mxu0 %v562
          %660 = vmatprep.subr.bf16.mxu0 0
          %661 = vmatpush1.bf16.msra.mxu0 %v563
          %662 = vmatprep.subr.bf16.mxu0 0
          %663 = vmatpush1.bf16.msra.mxu0 %v564
          %664 = vmatprep.subr.bf16.mxu0 0
          %665 = vmatpush1.bf16.msra.mxu0 %v565
          %666 = vmatprep.subr.bf16.mxu0 0
          %667 = vmatpush1.bf16.msra.mxu0 %v566
          %668 = vmatprep.subr.bf16.mxu0 0
          %669 = vmatpush1.bf16.msra.mxu0 %v567
          %670 = vmatprep.subr.bf16.mxu0 0
          %671 = vmatpush1.bf16.msra.mxu0 %v568
          %672 = vmatprep.subr.bf16.mxu0 0
          %673 = vmatpush1.bf16.msra.mxu0 %v569
          %674 = vmatprep.mubr.bf16.mxu0 %v345
          %675 = vmatmul.mubr.bf16.gmra.mrb[0].mxu0 %v344
          %v676 = vpop.f32.mrb[0].mxu0
          %v677 = vadd.f32 %v637, %v676
          %v678 = vpop.f32.mrb[0].mxu0
          %v679 = vpop.f32.mrb[0].mxu0
          %v680 = vpop.f32.mrb[0].mxu0
          %681 = vdwg.mxu0
          %v682 = vrot.slane %v677, 4
          %v683 = vadd.f32 %v677, %v682
          %v684 = vrot.slane %v683, 2
          %v685 = vadd.f32 %v683, %v684
          %v686 = vrot.slane %v685, 1
          %v687 = vadd.f32 %v685, %v686
          %v688 = vrcp.pop 8.0
          %v689 = vmul.f32 %v687, %v688
          %v690 = vsub.f32 %v677, %v689
          %v691 = vmul.f32 %v690, %v690
          %v692 = vrot.slane %v691, 4
          %v693 = vadd.f32 %v691, %v692
          %v694 = vrot.slane %v693, 2
          %v695 = vadd.f32 %v693, %v694
          %v696 = vrot.slane %v695, 1
          %v697 = vadd.f32 %v695, %v696
          %v698 = vmul.f32 %v697, %v688
          %v699 = vadd.f32 %v698, 1e-05
          %v700 = vrsqrt.pop %v699
          %v701 = vld [vmem:[%s2] sm:$0x1]
          %v702 = vmul.f32 %v700, %v701
          %v703 = vlaneseq
          %v704 = vshrl.u32 %v703, 7
          %v705 = vsub.s32 0, %v704
          %v706 = vrot.slane %v702, %v705
          %v707 = vmul.f32 %v690, %v706
          %v708 = vld [vmem:[%s3] sm:$0x1]
          %v710 = vlaneseq
          %v711 = vshrl.u32 %v710, 7
          %v712 = vsub.s32 0, %v711
          %v713 = vrot.slane %v708, %v712
          %v715 = vadd.f32 %v707, %v713
          %v716 = vmax.f32 %v715, 0.0
          %v717 = vpack.c.bf16 %v716, %v716
          %718 = vst [vmem:[#allocation2] sm:$0xf] %v717
        $region64: #{prediction_mlp_forward.1} parent=43 // pred_fallthru
          _
        %v719 = vld [vmem:[#allocation2] sm:$0xf]
        %v720 = vld [vmem:[%s287] sm:$0xff]
        %v721 = vld [vmem:[%s287 + $0x8] sm:$0xff]
        %v722 = vld [vmem:[%s287 + $0x10] sm:$0xff]
        %v723 = vld [vmem:[%s287 + $0x18] sm:$0xff]
        %v724 = vld [vmem:[%s287 + $0x20] sm:$0xff]
        %v725 = vld [vmem:[%s287 + $0x28] sm:$0xff]
        %v726 = vld [vmem:[%s287 + $0x30] sm:$0xff]
        %v727 = vld [vmem:[%s287 + $0x38] sm:$0xff]
        %v728 = vld [vmem:[%s287 + $0x40] sm:$0xff]
        %v729 = vld [vmem:[%s287 + $0x48] sm:$0xff]
        %v730 = vld [vmem:[%s287 + $0x50] sm:$0xff]
        %v731 = vld [vmem:[%s287 + $0x58] sm:$0xff]
        %v732 = vld [vmem:[%s287 + $0x60] sm:$0xff]
        %v733 = vld [vmem:[%s287 + $0x68] sm:$0xff]
        %v734 = vld [vmem:[%s287 + $0x70] sm:$0xff]
        %v735 = vld [vmem:[%s287 + $0x78] sm:$0xff]
        %v736 = vld [vmem:[%s296] sm:$0x3]
        %v738 = vlaneseq
        %v739 = vshrl.u32 %v738, 7
        %v740 = vsub.s32 0, %v739
        %v741 = vrot.slane %v736, %v740
        %v742 = vlaneseq
        %v743 = vshrl.u32 %v742, 7
        %v744 = vsub.s32 1, %v743
        %v745 = vrot.slane %v736, %v744
        %v764 = vunpack.c.l.b16 %v720
        %v765 = vunpack.c.h.b16 %v720
        %v766 = vunpack.c.l.b16 %v721
        %v767 = vunpack.c.h.b16 %v721
        %v768 = vunpack.c.l.b16 %v722
        %v769 = vunpack.c.h.b16 %v722
        %v770 = vunpack.c.l.b16 %v723
        %v771 = vunpack.c.h.b16 %v723
        %v772 = vunpack.c.l.b16 %v724
        %v773 = vunpack.c.h.b16 %v724
        %v774 = vunpack.c.l.b16 %v725
        %v775 = vunpack.c.h.b16 %v725
        %v776 = vunpack.c.l.b16 %v726
        %v777 = vunpack.c.h.b16 %v726
        %v778 = vunpack.c.l.b16 %v727
        %v779 = vunpack.c.h.b16 %v727
        %v780 = vunpack.c.l.b16 %v728
        %v781 = vunpack.c.h.b16 %v728
        %v782 = vunpack.c.l.b16 %v729
        %v783 = vunpack.c.h.b16 %v729
        %v784 = vunpack.c.l.b16 %v730
        %v785 = vunpack.c.h.b16 %v730
        %v786 = vunpack.c.l.b16 %v731
        %v787 = vunpack.c.h.b16 %v731
        %v788 = vunpack.c.l.b16 %v732
        %v789 = vunpack.c.h.b16 %v732
        %v790 = vunpack.c.l.b16 %v733
        %v791 = vunpack.c.h.b16 %v733
        %v792 = vunpack.c.l.b16 %v734
        %v793 = vunpack.c.h.b16 %v734
        %v794 = vunpack.c.l.b16 %v735
        %v795 = vunpack.c.h.b16 %v735
        %v796 = vpack.c.b16 %v766, %v764
        %v797 = vpack.c.b16 %v767, %v765
        %v798 = vpack.c.b16 %v770, %v768
        %v799 = vpack.c.b16 %v771, %v769
        %v800 = vpack.c.b16 %v774, %v772
        %v801 = vpack.c.b16 %v775, %v773
        %v802 = vpack.c.b16 %v778, %v776
        %v803 = vpack.c.b16 %v779, %v777
        %v804 = vpack.c.b16 %v782, %v780
        %v805 = vpack.c.b16 %v783, %v781
        %v806 = vpack.c.b16 %v786, %v784
        %v807 = vpack.c.b16 %v787, %v785
        %v808 = vpack.c.b16 %v790, %v788
        %v809 = vpack.c.b16 %v791, %v789
        %v810 = vpack.c.b16 %v794, %v792
        %v811 = vpack.c.b16 %v795, %v793
        %828 = vmatprep.subr.bf16.mxu0 %v797
        %829 = vmatpush1.bf16.msra.mxu0 %v796
        %830 = vmatprep.subr.bf16.mxu0 %v799
        %831 = vmatpush1.bf16.msra.mxu0 %v798
        %832 = vmatprep.subr.bf16.mxu0 %v801
        %833 = vmatpush1.bf16.msra.mxu0 %v800
        %834 = vmatprep.subr.bf16.mxu0 %v803
        %835 = vmatpush1.bf16.msra.mxu0 %v802
        %836 = vmatprep.subr.bf16.mxu0 %v805
        %837 = vmatpush1.bf16.msra.mxu0 %v804
        %838 = vmatprep.subr.bf16.mxu0 %v807
        %839 = vmatpush1.bf16.msra.mxu0 %v806
        %840 = vmatprep.subr.bf16.mxu0 %v809
        %841 = vmatpush1.bf16.msra.mxu0 %v808
        %842 = vmatprep.subr.bf16.mxu0 %v811
        %843 = vmatpush1.bf16.msra.mxu0 %v810
        %844 = vmatprep.subr.bf16.mxu0 0
        %845 = vmatpush1.bf16.msra.mxu0 0
        %846 = vmatprep.subr.bf16.mxu0 0
        %847 = vmatpush1.bf16.msra.mxu0 0
        %848 = vmatprep.subr.bf16.mxu0 0
        %849 = vmatpush1.bf16.msra.mxu0 0
        %850 = vmatprep.subr.bf16.mxu0 0
        %851 = vmatpush1.bf16.msra.mxu0 0
        %852 = vmatprep.subr.bf16.mxu0 0
        %853 = vmatpush1.bf16.msra.mxu0 0
        %854 = vmatprep.subr.bf16.mxu0 0
        %855 = vmatpush1.bf16.msra.mxu0 0
        %856 = vmatprep.subr.bf16.mxu0 0
        %857 = vmatpush1.bf16.msra.mxu0 0
        %858 = vmatprep.subr.bf16.mxu0 0
        %859 = vmatpush1.bf16.msra.mxu0 0
        %860 = vmatprep.mubr.bf16.mxu0 0
        %861 = vmatmul.mubr.bf16.gmra.mrb[0].mxu0 %v719
        %v862 = vpop.f32.mrb[0].mxu0
        %v863 = vadd.f32 %v741, %v862
        %v864 = vpop.f32.mrb[0].mxu0
        %v865 = vadd.f32 %v745, %v864
        %v866 = vpop.f32.mrb[0].mxu0
        %v867 = vpop.f32.mrb[0].mxu0
        %868 = vdwg.mxu0
        %869 = vst [vmem:[%s329] sm:$0xff] %v863
        %870 = vst [vmem:[%s329 + $0x8] sm:$0xff] %v865
        %s871 = sand.u32 %s166, 1
        %s872 = scalar_lea.sflag [#allocation5], %s871
        %s873 = sand.u32 %s166, 1
        %s874 = smul.addr %s873, 16
        %s875 = scalar_lea.vmem [#allocation10], %s874
        // Predicated region
        $region65: #{prediction_mlp_forward.1} parent=43 // pred_check
          %p876 = pneg %p176
        $region66: #{prediction_mlp_forward.1} parent=43 // pred_check_branch
          %878 = sbr.rel (%p876) target = $region68
        $region67: #{prediction_mlp_forward.1} parent=43 // pred_region
          %s879 = smul.u32 2, %s22
          %s881 = ssub.s32 256, 256
          %882 = vsyncadd %s872, %s881
          %s883 = smul.addr %s879, 128
          %s884 = scalar_lea.hbm %s6, %s883
          %s886 = sshll.u32 %s875, 4
          %s887 = int_to_ptr.vmem [resolvable:$true] %s886
          %889 = dma.vmem_to_hbm [thread:$0]  %s887, 256, %s884, %s872
        $region68: #{prediction_mlp_forward.1} parent=43 // pred_fallthru
          _
      $region44: #{prediction_mlp_forward.1} parent=5 // pred_fallthru
        _
      %p890 = scmp.le.s32.totalorder 2, %s17
      // Predicated region
      $region69: #{prediction_mlp_forward.1} parent=5 // pred_check
        %p891 = pneg %p890
      $region70: #{prediction_mlp_forward.1} parent=5 // pred_check_branch
        %893 = sbr.rel (%p891) target = $region72
      $region71: #{prediction_mlp_forward.1} parent=5 // pred_region
        %s894 = ssub.s32 %s17, 2
        // Predicated region
        $region73: #{prediction_mlp_forward.1} parent=71 // pred_check
          %p895 = pneg %p182
        $region74: #{prediction_mlp_forward.1} parent=71 // pred_check_branch
          %897 = sbr.rel (%p895) target = $region76
        $region75: #{prediction_mlp_forward.1} parent=71 // pred_region
          %s898 = sand.u32 %s167, 1
          %s899 = scalar_lea.sflag [#allocation5], %s898
          %s900 = sand.u32 %s167, 1
          %s901 = smul.addr %s900, 16
          %s902 = scalar_lea.vmem [#allocation10], %s901
          %903 = dma.done %s899, 256
        $region76: #{prediction_mlp_forward.1} parent=71 // pred_fallthru
          _
      $region72: #{prediction_mlp_forward.1} parent=5 // pred_fallthru
        _
    $region6: #{prediction_mlp_forward.1} parent=1 // loop_footer
      %s21 = sadd.s32 1, %s17
    $region7: #{prediction_mlp_forward.1} parent=1 // loop_footer_branch
      %16 = sbr.rel target = $region3
    $region8: #{prediction_mlp_forward.1} parent=1 // loop_exit
      _
    %904 = vsyncpa [#allocation4], 1
    %s905 = scalar_lea.sflag [#allocation4], 1
    %906 = vsyncpa %s905, 1
    %907 = vsyncpa [#allocation7], 1
    %908 = vsyncpa [#allocation5], 1
    %s909 = scalar_lea.sflag [#allocation5], 1
    %910 = vsyncpa %s909, 1

</llo_original>
